<compile_context>
chip_gen: v7x
topology: tpu7x:2x2x1
jax: 0.10.0
libtpu: 0.0.40
codegen_flags: <defaults>
</compile_context>

<pallas_src>
import jax
import jax.numpy as jnp
from jax.experimental import pallas as pl
from jax.experimental.pallas import tpu as pltpu

D_IN, D_H1, D_H2, D_H3, D_OUT = 4, 256, 128, 64, 4


def mlp_kernel(x_ref, w1_ref, b1_ref, w2_ref, b2_ref, w3_ref, b3_ref,
               w4_ref, b4_ref, o_ref):
    x = x_ref[...]              # (block_b, 4)  f32
    w1 = w1_ref[...]            # (4, 256)      f32

    # fc1 + ReLU on the VPU: contraction depth is 4, so 4 broadcast-FMAs beat a
    # K-padded MXU dot and keep the first layer in full f32.
    h = b1_ref[...] + x[:, 0:1] * w1[0:1, :]
    h = h + x[:, 1:2] * w1[1:2, :]
    h = h + x[:, 2:3] * w1[2:3, :]
    h = h + x[:, 3:4] * w1[3:4, :]
    h = jnp.maximum(h, 0.0).astype(jnp.bfloat16)   # fused ReLU + bf16 downcast

    # dropout(p=0.25) -> identity in eval/inference mode (no-op)
    # TODO(synk): training-mode dropout (PRNG mask) not implemented.

    # fc2 + ReLU  (bf16 MXU operands, f32 accumulate)
    h = jnp.dot(h, w2_ref[...], preferred_element_type=jnp.float32)
    h = jnp.maximum(h + b2_ref[...], 0.0).astype(jnp.bfloat16)

    # fc3 + ReLU
    h = jnp.dot(h, w3_ref[...], preferred_element_type=jnp.float32)
    h = jnp.maximum(h + b3_ref[...], 0.0).astype(jnp.bfloat16)

    # fc4 (no activation)
    h = jnp.dot(h, w4_ref[...], preferred_element_type=jnp.float32) + b4_ref[...]
    o_ref[...] = h.astype(o_ref.dtype)


def _round_up(x, m):
    return (x + m - 1) // m * m


def pack_params(params):
    """One-time packing: cast MXU-facing weights to bf16 (fc1 stays f32, it runs
    on the VPU). Call once, outside the forward path."""
    w1, b1, w2, b2, w3, b3, w4, b4 = params
    return (w1, b1,
            w2.astype(jnp.bfloat16), b2,
            w3.astype(jnp.bfloat16), b3,
            w4.astype(jnp.bfloat16), b4)


@jax.jit
def mlp_forward(x, packed_params):
    B, F_in = x.shape
    assert F_in == D_IN
    w1, b1, w2, b2, w3, b3, w4, b4 = packed_params

    # block_b <= 512: >=2 grid steps once B > 512 so the BlockSpec pipeline can
    # overlap DMA-in / compute / DMA-out and v7x megacore can shard the batch
    # axis across both TensorCores. VMEM per step is < 1 MiB (v5e-safe).
    b8 = _round_up(B, 8)
    block_b = b8 if b8 <= 512 else 512
    B_pad = _round_up(B, block_b)
    x_pad = x if B_pad == B else jnp.pad(x, ((0, B_pad - B), (0, 0)))

    def full_spec(shape):
        return pl.BlockSpec(shape, lambda i: (0,) * len(shape))

    out = pl.pallas_call(
        mlp_kernel,
        out_shape=jax.ShapeDtypeStruct((B_pad, D_OUT), x.dtype),
        grid_spec=pltpu.PrefetchScalarGridSpec(
            num_scalar_prefetch=0,
            grid=(B_pad // block_b,),
            in_specs=[
                pl.BlockSpec((block_b, D_IN), lambda i: (i, 0)),
                full_spec(w1.shape), full_spec(b1.shape),
                full_spec(w2.shape), full_spec(b2.shape),
                full_spec(w3.shape), full_spec(b3.shape),
                full_spec(w4.shape), full_spec(b4.shape),
            ],
            out_specs=pl.BlockSpec((block_b, D_OUT), lambda i: (i, 0)),
        ),
        compiler_params=pltpu.CompilerParams(
            dimension_semantics=("parallel",)),
    )(x_pad, w1, b1, w2, b2, w3, b3, w4, b4)

    return out if B_pad == B else out[:B]


def init_params(key):
    """Deterministic init matching nn.Linear shapes:
       fc1: (4->256), fc2: (256->128), fc3: (128->64), fc4: (64->4).
       Stored as (in, out) for the x @ W convention; biases as (1, out)."""
    dims = [(D_IN, D_H1), (D_H1, D_H2), (D_H2, D_H3), (D_H3, D_OUT)]
    params = []
    for (d_in, d_out) in dims:
        key, kw, kb = jax.random.split(key, 3)
        bound = 1.0 / (d_in ** 0.5)  # PyTorch default uniform bound
        w = jax.random.uniform(kw, (d_in, d_out), jnp.float32, -bound, bound)
        b = jax.random.uniform(kb, (1, d_out), jnp.float32, -bound, bound)
        params += [w, b]
    return tuple(params)


def mlp_ref(x, params):
    w1, b1, w2, b2, w3, b3, w4, b4 = params
    h = jnp.maximum(x @ w1 + b1, 0.0)
    h = jnp.maximum(h @ w2 + b2, 0.0)
    h = jnp.maximum(h @ w3 + b3, 0.0)
    return h @ w4 + b4


if __name__ == "__main__":
    key = jax.random.PRNGKey(0)
    key, kx = jax.random.split(key)
    batch = 8
    x = jax.random.normal(kx, (batch, D_IN), jnp.float32)

    params = init_params(key)
    packed = pack_params(params)          # one-time bf16 weight packing

    out = mlp_forward(x, packed)
    jax.block_until_ready(out)

    ref = mlp_ref(x, params)
    assert out.shape == (batch, D_OUT)
    # fc2-fc4 use bf16 MXU operands with f32 accumulation -> loosened tolerance
    # vs the pure-f32 reference.
    assert jnp.allclose(out, ref, atol=2e-2, rtol=2e-2), float(jnp.max(jnp.abs(out - ref)))
    print("KERNEL_OK")
</pallas_src>

<mosaic_0001>
module attributes {stable_mosaic.version = 11 : i64} {
  func.func @mlp_kernel(%arg0: i32, %arg1: memref<8x4xf32, #tpu.memory_space<vmem>>, %arg2: memref<4x256xf32, #tpu.memory_space<vmem>>, %arg3: memref<1x256xf32, #tpu.memory_space<vmem>>, %arg4: memref<256x128xbf16, #tpu.memory_space<vmem>>, %arg5: memref<1x128xf32, #tpu.memory_space<vmem>>, %arg6: memref<128x64xbf16, #tpu.memory_space<vmem>>, %arg7: memref<1x64xf32, #tpu.memory_space<vmem>>, %arg8: memref<64x4xbf16, #tpu.memory_space<vmem>>, %arg9: memref<1x4xf32, #tpu.memory_space<vmem>>, %arg10: memref<8x4xf32, #tpu.memory_space<vmem>>) attributes {dimension_semantics = [#tpu.dimension_semantics<parallel>], iteration_bounds = array<i64: 1>, scalar_prefetch = 0 : i64, scratch_operands = 0 : i64, tpu.core_type = #tpu.core_type<tc>, window_params = [{transform_indices = @transform_0, window_bounds = array<i64: 8, 4>}, {pipeline_mode = #tpu.pipeline_mode<synchronous>, transform_indices = @transform_1, window_bounds = array<i64: 4, 256>}, {pipeline_mode = #tpu.pipeline_mode<synchronous>, transform_indices = @transform_2, window_bounds = array<i64: 1, 256>}, {pipeline_mode = #tpu.pipeline_mode<synchronous>, transform_indices = @transform_3, window_bounds = array<i64: 256, 128>}, {pipeline_mode = #tpu.pipeline_mode<synchronous>, transform_indices = @transform_4, window_bounds = array<i64: 1, 128>}, {pipeline_mode = #tpu.pipeline_mode<synchronous>, transform_indices = @transform_5, window_bounds = array<i64: 128, 64>}, {pipeline_mode = #tpu.pipeline_mode<synchronous>, transform_indices = @transform_6, window_bounds = array<i64: 1, 64>}, {pipeline_mode = #tpu.pipeline_mode<synchronous>, transform_indices = @transform_7, window_bounds = array<i64: 64, 4>}, {pipeline_mode = #tpu.pipeline_mode<synchronous>, transform_indices = @transform_8, window_bounds = array<i64: 1, 4>}, {transform_indices = @transform_9, window_bounds = array<i64: 8, 4>}]} {
    %c0 = arith.constant 0 : index
    %c0_0 = arith.constant 0 : index
    %0 = vector.load %arg1[%c0, %c0_0] : memref<8x4xf32, #tpu.memory_space<vmem>>, vector<8x4xf32>
    %c0_1 = arith.constant 0 : index
    %c0_2 = arith.constant 0 : index
    %1 = vector.load %arg2[%c0_1, %c0_2] : memref<4x256xf32, #tpu.memory_space<vmem>>, vector<4x256xf32>
    %c0_3 = arith.constant 0 : index
    %c0_4 = arith.constant 0 : index
    %2 = vector.load %arg3[%c0_3, %c0_4] : memref<1x256xf32, #tpu.memory_space<vmem>>, vector<1x256xf32>
    %3 = vector.extract_strided_slice %0 {offsets = [0, 0], sizes = [8, 1], strides = [1, 1]} : vector<8x4xf32> to vector<8x1xf32>
    %4 = vector.extract_strided_slice %1 {offsets = [0, 0], sizes = [1, 256], strides = [1, 1]} : vector<4x256xf32> to vector<1x256xf32>
    %5 = vector.broadcast %3 : vector<8x1xf32> to vector<8x256xf32>
    %6 = vector.broadcast %4 : vector<1x256xf32> to vector<8x256xf32>
    %7 = arith.mulf %5, %6 : vector<8x256xf32>
    %8 = vector.broadcast %2 : vector<1x256xf32> to vector<8x256xf32>
    %9 = arith.addf %8, %7 : vector<8x256xf32>
    %10 = vector.extract_strided_slice %0 {offsets = [0, 1], sizes = [8, 1], strides = [1, 1]} : vector<8x4xf32> to vector<8x1xf32>
    %11 = vector.extract_strided_slice %1 {offsets = [1, 0], sizes = [1, 256], strides = [1, 1]} : vector<4x256xf32> to vector<1x256xf32>
    %12 = vector.broadcast %10 : vector<8x1xf32> to vector<8x256xf32>
    %13 = vector.broadcast %11 : vector<1x256xf32> to vector<8x256xf32>
    %14 = arith.mulf %12, %13 : vector<8x256xf32>
    %15 = arith.addf %9, %14 : vector<8x256xf32>
    %16 = vector.extract_strided_slice %0 {offsets = [0, 2], sizes = [8, 1], strides = [1, 1]} : vector<8x4xf32> to vector<8x1xf32>
    %17 = vector.extract_strided_slice %1 {offsets = [2, 0], sizes = [1, 256], strides = [1, 1]} : vector<4x256xf32> to vector<1x256xf32>
    %18 = vector.broadcast %16 : vector<8x1xf32> to vector<8x256xf32>
    %19 = vector.broadcast %17 : vector<1x256xf32> to vector<8x256xf32>
    %20 = arith.mulf %18, %19 : vector<8x256xf32>
    %21 = arith.addf %15, %20 : vector<8x256xf32>
    %22 = vector.extract_strided_slice %0 {offsets = [0, 3], sizes = [8, 1], strides = [1, 1]} : vector<8x4xf32> to vector<8x1xf32>
    %23 = vector.extract_strided_slice %1 {offsets = [3, 0], sizes = [1, 256], strides = [1, 1]} : vector<4x256xf32> to vector<1x256xf32>
    %24 = vector.broadcast %22 : vector<8x1xf32> to vector<8x256xf32>
    %25 = vector.broadcast %23 : vector<1x256xf32> to vector<8x256xf32>
    %26 = arith.mulf %24, %25 : vector<8x256xf32>
    %27 = arith.addf %21, %26 : vector<8x256xf32>
    %cst = arith.constant 0.000000e+00 : f32
    %28 = vector.broadcast %cst : f32 to vector<8x256xf32>
    %29 = arith.maximumf %27, %28 : vector<8x256xf32>
    %30 = arith.truncf %29 : vector<8x256xf32> to vector<8x256xbf16>
    %c0_5 = arith.constant 0 : index
    %c0_6 = arith.constant 0 : index
    %31 = vector.load %arg4[%c0_5, %c0_6] : memref<256x128xbf16, #tpu.memory_space<vmem>>, vector<256x128xbf16>
    %cst_7 = arith.constant dense<0.000000e+00> : vector<8x128xf32>
    %32 = tpu.matmul %30, %31, %cst_7 {dimension_numbers = #tpu.dot_dimension_numbers<[1], [0], [0], [1], [0, 0, 1, 1], [], []>} : vector<8x256xbf16>, vector<256x128xbf16>, vector<8x128xf32> -> vector<8x128xf32>
    %c0_8 = arith.constant 0 : index
    %c0_9 = arith.constant 0 : index
    %33 = vector.load %arg5[%c0_8, %c0_9] : memref<1x128xf32, #tpu.memory_space<vmem>>, vector<1x128xf32>
    %34 = vector.broadcast %33 : vector<1x128xf32> to vector<8x128xf32>
    %35 = arith.addf %32, %34 : vector<8x128xf32>
    %cst_10 = arith.constant 0.000000e+00 : f32
    %36 = vector.broadcast %cst_10 : f32 to vector<8x128xf32>
    %37 = arith.maximumf %35, %36 : vector<8x128xf32>
    %38 = arith.truncf %37 : vector<8x128xf32> to vector<8x128xbf16>
    %c0_11 = arith.constant 0 : index
    %c0_12 = arith.constant 0 : index
    %39 = vector.load %arg6[%c0_11, %c0_12] : memref<128x64xbf16, #tpu.memory_space<vmem>>, vector<128x64xbf16>
    %cst_13 = arith.constant dense<0.000000e+00> : vector<8x64xf32>
    %40 = tpu.matmul %38, %39, %cst_13 {dimension_numbers = #tpu.dot_dimension_numbers<[1], [0], [0], [1], [0, 0, 1, 1], [], []>} : vector<8x128xbf16>, vector<128x64xbf16>, vector<8x64xf32> -> vector<8x64xf32>
    %c0_14 = arith.constant 0 : index
    %c0_15 = arith.constant 0 : index
    %41 = vector.load %arg7[%c0_14, %c0_15] : memref<1x64xf32, #tpu.memory_space<vmem>>, vector<1x64xf32>
    %42 = vector.broadcast %41 : vector<1x64xf32> to vector<8x64xf32>
    %43 = arith.addf %40, %42 : vector<8x64xf32>
    %cst_16 = arith.constant 0.000000e+00 : f32
    %44 = vector.broadcast %cst_16 : f32 to vector<8x64xf32>
    %45 = arith.maximumf %43, %44 : vector<8x64xf32>
    %46 = arith.truncf %45 : vector<8x64xf32> to vector<8x64xbf16>
    %c0_17 = arith.constant 0 : index
    %c0_18 = arith.constant 0 : index
    %47 = vector.load %arg8[%c0_17, %c0_18] : memref<64x4xbf16, #tpu.memory_space<vmem>>, vector<64x4xbf16>
    %cst_19 = arith.constant dense<0.000000e+00> : vector<8x4xf32>
    %48 = tpu.matmul %46, %47, %cst_19 {dimension_numbers = #tpu.dot_dimension_numbers<[1], [0], [0], [1], [0, 0, 1, 1], [], []>} : vector<8x64xbf16>, vector<64x4xbf16>, vector<8x4xf32> -> vector<8x4xf32>
    %c0_20 = arith.constant 0 : index
    %c0_21 = arith.constant 0 : index
    %49 = vector.load %arg9[%c0_20, %c0_21] : memref<1x4xf32, #tpu.memory_space<vmem>>, vector<1x4xf32>
    %50 = vector.broadcast %49 : vector<1x4xf32> to vector<8x4xf32>
    %51 = arith.addf %48, %50 : vector<8x4xf32>
    %c0_22 = arith.constant 0 : index
    %c0_23 = arith.constant 0 : index
    %52 = vector.load %arg10[%c0_22, %c0_23] : memref<8x4xf32, #tpu.memory_space<vmem>>, vector<8x4xf32>
    tpu.vector_store %arg10[%c0_22, %c0_23], %51 {strides = array<i32>} : memref<8x4xf32, #tpu.memory_space<vmem>>, vector<8x4xf32>,
    return
  }
  func.func @transform_0(%arg0: i32) -> (i32, i32) {
    %c0_i32 = arith.constant 0 : i32
    %c0_i32_0 = arith.constant 0 : i32
    return %arg0, %c0_i32 : i32, i32
  }
  func.func @transform_1(%arg0: i32) -> (i32, i32) {
    %c0_i32 = arith.constant 0 : i32
    %c0_i32_0 = arith.constant 0 : i32
    %c0_i32_1 = arith.constant 0 : i32
    return %c0_i32, %c0_i32_0 : i32, i32
  }
  func.func @transform_2(%arg0: i32) -> (i32, i32) {
    %c0_i32 = arith.constant 0 : i32
    %c0_i32_0 = arith.constant 0 : i32
    %c0_i32_1 = arith.constant 0 : i32
    return %c0_i32, %c0_i32_0 : i32, i32
  }
  func.func @transform_3(%arg0: i32) -> (i32, i32) {
    %c0_i32 = arith.constant 0 : i32
    %c0_i32_0 = arith.constant 0 : i32
    %c0_i32_1 = arith.constant 0 : i32
    return %c0_i32, %c0_i32_0 : i32, i32
  }
  func.func @transform_4(%arg0: i32) -> (i32, i32) {
    %c0_i32 = arith.constant 0 : i32
    %c0_i32_0 = arith.constant 0 : i32
    %c0_i32_1 = arith.constant 0 : i32
    return %c0_i32, %c0_i32_0 : i32, i32
  }
  func.func @transform_5(%arg0: i32) -> (i32, i32) {
    %c0_i32 = arith.constant 0 : i32
    %c0_i32_0 = arith.constant 0 : i32
    %c0_i32_1 = arith.constant 0 : i32
    return %c0_i32, %c0_i32_0 : i32, i32
  }
  func.func @transform_6(%arg0: i32) -> (i32, i32) {
    %c0_i32 = arith.constant 0 : i32
    %c0_i32_0 = arith.constant 0 : i32
    %c0_i32_1 = arith.constant 0 : i32
    return %c0_i32, %c0_i32_0 : i32, i32
  }
  func.func @transform_7(%arg0: i32) -> (i32, i32) {
    %c0_i32 = arith.constant 0 : i32
    %c0_i32_0 = arith.constant 0 : i32
    %c0_i32_1 = arith.constant 0 : i32
    return %c0_i32, %c0_i32_0 : i32, i32
  }
  func.func @transform_8(%arg0: i32) -> (i32, i32) {
    %c0_i32 = arith.constant 0 : i32
    %c0_i32_0 = arith.constant 0 : i32
    %c0_i32_1 = arith.constant 0 : i32
    return %c0_i32, %c0_i32_0 : i32, i32
  }
  func.func @transform_9(%arg0: i32) -> (i32, i32) {
    %c0_i32 = arith.constant 0 : i32
    %c0_i32_0 = arith.constant 0 : i32
    return %arg0, %c0_i32 : i32, i32
  }
}

</mosaic_0001>

<llo_original>
// kernel: mlp_forward.1
$region0: #{mlp_forward.1}
  #allocation0 [shape = 'u32[]', space=smem, size = 0x4, offset = 0x4, fixed_abs, tag = 'smem constant byte address 0x4 - core index']
  #allocation1 [shape = 'u32[144,128]{1,0:T(1,128)}', space=vmem, size = 0x12000, scoped, tag = 'internal scratch']
  %s0 = inlined_call_operand.vmem [shape: f32[8,4], index: 0, kind: input, shape index: {}]
  %s1 = inlined_call_operand.hbm [shape: f32[4,256], index: 1, kind: input, shape index: {}]
  %s2 = inlined_call_operand.hbm [shape: f32[1,256], index: 2, kind: input, shape index: {}]
  %s3 = inlined_call_operand.vmem [shape: bf16[256,128], index: 3, kind: input, shape index: {}]
  %s4 = inlined_call_operand.hbm [shape: f32[1,128], index: 4, kind: input, shape index: {}]
  %s5 = inlined_call_operand.vmem [shape: bf16[128,64], index: 5, kind: input, shape index: {}]
  %s6 = inlined_call_operand.vmem [shape: f32[1,64], index: 6, kind: input, shape index: {}]
  %s7 = inlined_call_operand.vmem [shape: bf16[64,4], index: 7, kind: input, shape index: {}]
  %s8 = inlined_call_operand.vmem [shape: f32[1,4], index: 8, kind: input, shape index: {}]
  %s9 = inlined_call_operand.vmem [shape: f32[8,4], index: 9, kind: output, shape index: {}]
  %s10 = sld [smem:[#allocation0]]
  $region58: #{mlp_forward.1} parent=0
    _
  %s12 = ssub.s32 1, %s10
  %s13 = scalar_select 0, %s12, %s10
  $region1: #{mlp_forward.1} parent=0
    #allocation2 [shape = 'u8[4096]{0}', space=vmem, size = 0x1000, scoped, tag = 'input window, operand 1, single buffered']
    #allocation3 [shape = 's32[1]{0}', space=sflag, size = 0x4, scoped, tag = 'scoped memory for mlp_forward.1']
    #allocation4 [shape = 'u8[1024]{0}', space=vmem, size = 0x400, scoped, tag = 'input window, operand 2, single buffered']
    #allocation5 [shape = 's32[1]{0}', space=sflag, size = 0x4, scoped, tag = 'scoped memory for mlp_forward.1']
    #allocation6 [shape = 'u8[512]{0}', space=vmem, size = 0x400, scoped, tag = 'input window, operand 4, single buffered']
    %14 = vsyncpa [#allocation3], 0
    %15 = vsyncpa [#allocation5], 0
    // Predicated region
    $region2: #{mlp_forward.1} parent=1 // pred_check
      _
    $region3: #{mlp_forward.1} parent=1 // pred_check_branch
      %17 = sbr.rel (0) target = $region5
    $region4: #{mlp_forward.1} parent=1 // pred_region
      _
    $region5: #{mlp_forward.1} parent=1 // pred_fallthru
      _
    // Predicated region
    $region6: #{mlp_forward.1} parent=1 // pred_check
      _
    $region7: #{mlp_forward.1} parent=1 // pred_check_branch
      %19 = sbr.rel (0) target = $region9
    $region8: #{mlp_forward.1} parent=1 // pred_region
      %s21 = ssub.s32 128, 128
      %22 = vsyncadd [#allocation3], %s21
      %s24 = sshll.u32 [#allocation2], 4
      %s25 = int_to_ptr.vmem [resolvable:$true] %s24
      %27 = dma.hbm_to_vmem [thread:$0]  %s1, 128, %s25, [#allocation3]
    $region9: #{mlp_forward.1} parent=1 // pred_fallthru
      _
    // Predicated region
    $region10: #{mlp_forward.1} parent=1 // pred_check
      _
    $region11: #{mlp_forward.1} parent=1 // pred_check_branch
      %29 = sbr.rel (0) target = $region13
    $region12: #{mlp_forward.1} parent=1 // pred_region
      %s31 = ssub.s32 32, 32
      %32 = vsyncadd [#allocation5], %s31
      %s34 = sshll.u32 [#allocation4], 4
      %s35 = int_to_ptr.vmem [resolvable:$true] %s34
      %37 = dma.hbm_to_vmem [thread:$0]  %s2, 32, %s35, [#allocation5]
    $region13: #{mlp_forward.1} parent=1 // pred_fallthru
      _
    // Predicated region
    $region14: #{mlp_forward.1} parent=1 // pred_check
      _
    $region15: #{mlp_forward.1} parent=1 // pred_check_branch
      %39 = sbr.rel (0) target = $region17
    $region16: #{mlp_forward.1} parent=1 // pred_region
      _
    $region17: #{mlp_forward.1} parent=1 // pred_fallthru
      _
    // Predicated region
    $region18: #{mlp_forward.1} parent=1 // pred_check
      _
    $region19: #{mlp_forward.1} parent=1 // pred_check_branch
      %41 = sbr.rel (0) target = $region21
    $region20: #{mlp_forward.1} parent=1 // pred_region
      %s43 = ssub.s32 16, 16
      %44 = vsyncadd [#allocation5], %s43
      %s46 = sshll.u32 [#allocation6], 4
      %s47 = int_to_ptr.vmem [resolvable:$true] %s46
      %49 = dma.hbm_to_vmem [thread:$0]  %s4, 16, %s47, [#allocation5]
    $region21: #{mlp_forward.1} parent=1 // pred_fallthru
      _
    // Predicated region
    $region22: #{mlp_forward.1} parent=1 // pred_check
      _
    $region23: #{mlp_forward.1} parent=1 // pred_check_branch
      %51 = sbr.rel (0) target = $region25
    $region24: #{mlp_forward.1} parent=1 // pred_region
      _
    $region25: #{mlp_forward.1} parent=1 // pred_fallthru
      _
    // Predicated region
    $region26: #{mlp_forward.1} parent=1 // pred_check
      _
    $region27: #{mlp_forward.1} parent=1 // pred_check_branch
      %53 = sbr.rel (0) target = $region29
    $region28: #{mlp_forward.1} parent=1 // pred_region
      _
    $region29: #{mlp_forward.1} parent=1 // pred_fallthru
      _
    // Predicated region
    $region30: #{mlp_forward.1} parent=1 // pred_check
      _
    $region31: #{mlp_forward.1} parent=1 // pred_check_branch
      %55 = sbr.rel (0) target = $region33
    $region32: #{mlp_forward.1} parent=1 // pred_region
      _
    $region33: #{mlp_forward.1} parent=1 // pred_fallthru
      _
    // Predicated region
    $region34: #{mlp_forward.1} parent=1 // pred_check
      _
    $region35: #{mlp_forward.1} parent=1 // pred_check_branch
      %57 = sbr.rel (0) target = $region37
    $region36: #{mlp_forward.1} parent=1 // pred_region
      _
    $region37: #{mlp_forward.1} parent=1 // pred_fallthru
      _
    // Predicated region
    $region38: #{mlp_forward.1} parent=1 // pred_check
      _
    $region39: #{mlp_forward.1} parent=1 // pred_check_branch
      %59 = sbr.rel (0) target = $region41
    $region40: #{mlp_forward.1} parent=1 // pred_region
      %60 = dma.done [#allocation3], 128
    $region41: #{mlp_forward.1} parent=1 // pred_fallthru
      _
    // Predicated region
    $region42: #{mlp_forward.1} parent=1 // pred_check
      _
    $region43: #{mlp_forward.1} parent=1 // pred_check_branch
      %62 = sbr.rel (0) target = $region45
    $region44: #{mlp_forward.1} parent=1 // pred_region
      %63 = dma.done [#allocation5], 32
    $region45: #{mlp_forward.1} parent=1 // pred_fallthru
      _
    // Predicated region
    $region46: #{mlp_forward.1} parent=1 // pred_check
      _
    $region47: #{mlp_forward.1} parent=1 // pred_check_branch
      %65 = sbr.rel (0) target = $region49
    $region48: #{mlp_forward.1} parent=1 // pred_region
      %66 = dma.done [#allocation5], 16
    $region49: #{mlp_forward.1} parent=1 // pred_fallthru
      _
    %v68 = vld [vmem:[%s0] sm:$0xff]
    %v69 = vld [vmem:[#allocation2] sm:$0xff]
    %v70 = vld [vmem:[#allocation4] sm:$0x3]
    %72 = vset.pattern.permute.xlu0 0
    %73 = vperm.xlu0 %72, %v68
    %v74 = vpop.permute.xlu0 %73
    %v77 = vlaneseq
    %v78 = vshrl.u32 %v77, 7
    %v79 = vsub.s32 0, %v78
    %v80 = vrot.slane %v69, %v79
    %v81 = vlaneseq
    %v82 = vshrl.u32 %v81, 7
    %v83 = vsub.s32 4, %v82
    %v84 = vrot.slane %v69, %v83
    %v87 = vlaneseq
    %v88 = vshrl.u32 %v87, 7
    %v89 = vsub.s32 0, %v88
    %v90 = vrot.slane %v80, %v89
    %v91 = vlaneseq
    %v92 = vshrl.u32 %v91, 7
    %v93 = vsub.s32 0, %v92
    %v94 = vrot.slane %v84, %v93
    %v95 = vmul.f32 %v74, %v90
    %v96 = vmul.f32 %v74, %v94
    %v98 = vlaneseq
    %v99 = vshrl.u32 %v98, 7
    %v100 = vsub.s32 0, %v99
    %v101 = vrot.slane %v70, %v100
    %v102 = vlaneseq
    %v103 = vshrl.u32 %v102, 7
    %v104 = vsub.s32 1, %v103
    %v105 = vrot.slane %v70, %v104
    %v108 = vadd.f32 %v101, %v95
    %v109 = vadd.f32 %v105, %v96
    %110 = vset.pattern.permute.xlu0 1
    %111 = vperm.xlu0 %110, %v68
    %v112 = vpop.permute.xlu0 %111
    %v114 = vlaneseq
    %v115 = vshrl.u32 %v114, 7
    %v116 = vsub.s32 1, %v115
    %v117 = vrot.slane %v69, %v116
    %v118 = vlaneseq
    %v119 = vshrl.u32 %v118, 7
    %v120 = vsub.s32 5, %v119
    %v121 = vrot.slane %v69, %v120
    %v124 = vlaneseq
    %v125 = vshrl.u32 %v124, 7
    %v126 = vsub.s32 1, %v125
    %v127 = vrot.slane %v117, %v126
    %v128 = vlaneseq
    %v129 = vshrl.u32 %v128, 7
    %v130 = vsub.s32 1, %v129
    %v131 = vrot.slane %v121, %v130
    %v132 = vmul.f32 %v112, %v127
    %v133 = vmul.f32 %v112, %v131
    %v134 = vadd.f32 %v108, %v132
    %v135 = vadd.f32 %v109, %v133
    %136 = vset.pattern.permute.xlu0 2
    %137 = vperm.xlu0 %136, %v68
    %v138 = vpop.permute.xlu0 %137
    %v140 = vlaneseq
    %v141 = vshrl.u32 %v140, 7
    %v142 = vsub.s32 2, %v141
    %v143 = vrot.slane %v69, %v142
    %v144 = vlaneseq
    %v145 = vshrl.u32 %v144, 7
    %v146 = vsub.s32 6, %v145
    %v147 = vrot.slane %v69, %v146
    %v150 = vlaneseq
    %v151 = vshrl.u32 %v150, 7
    %v152 = vsub.s32 2, %v151
    %v153 = vrot.slane %v143, %v152
    %v154 = vlaneseq
    %v155 = vshrl.u32 %v154, 7
    %v156 = vsub.s32 2, %v155
    %v157 = vrot.slane %v147, %v156
    %v158 = vmul.f32 %v138, %v153
    %v159 = vmul.f32 %v138, %v157
    %v160 = vadd.f32 %v134, %v158
    %v161 = vadd.f32 %v135, %v159
    %162 = vset.pattern.permute.xlu0 3
    %163 = vperm.xlu0 %162, %v68
    %v164 = vpop.permute.xlu0 %163
    %v166 = vlaneseq
    %v167 = vshrl.u32 %v166, 7
    %v168 = vsub.s32 3, %v167
    %v169 = vrot.slane %v69, %v168
    %v170 = vlaneseq
    %v171 = vshrl.u32 %v170, 7
    %v172 = vsub.s32 7, %v171
    %v173 = vrot.slane %v69, %v172
    %v176 = vlaneseq
    %v177 = vshrl.u32 %v176, 7
    %v178 = vsub.s32 3, %v177
    %v179 = vrot.slane %v169, %v178
    %v180 = vlaneseq
    %v181 = vshrl.u32 %v180, 7
    %v182 = vsub.s32 3, %v181
    %v183 = vrot.slane %v173, %v182
    %v184 = vmul.f32 %v164, %v179
    %v185 = vmul.f32 %v164, %v183
    %v186 = vadd.f32 %v160, %v184
    %v187 = vadd.f32 %v161, %v185
    %v188 = vmax.f32 %v186, 0.0
    %v189 = vmax.f32 %v187, 0.0
    %v190 = vpack.c.bf16 %v188, %v188
    %v191 = vpack.c.bf16 %v189, %v189
    %v192 = vld [vmem:[%s3] sm:$0xf]
    %v193 = vld [vmem:[%s3 + $0x4] sm:$0xf]
    %v194 = vld [vmem:[%s3 + $0x8] sm:$0xf]
    %v195 = vld [vmem:[%s3 + $0xc] sm:$0xf]
    %v196 = vld [vmem:[%s3 + $0x10] sm:$0xf]
    %v197 = vld [vmem:[%s3 + $0x14] sm:$0xf]
    %v198 = vld [vmem:[%s3 + $0x18] sm:$0xf]
    %v199 = vld [vmem:[%s3 + $0x1c] sm:$0xf]
    %v200 = vld [vmem:[%s3 + $0x20] sm:$0xf]
    %v201 = vld [vmem:[%s3 + $0x24] sm:$0xf]
    %v202 = vld [vmem:[%s3 + $0x28] sm:$0xf]
    %v203 = vld [vmem:[%s3 + $0x2c] sm:$0xf]
    %v204 = vld [vmem:[%s3 + $0x30] sm:$0xf]
    %v205 = vld [vmem:[%s3 + $0x34] sm:$0xf]
    %v206 = vld [vmem:[%s3 + $0x38] sm:$0xf]
    %v207 = vld [vmem:[%s3 + $0x3c] sm:$0xf]
    %v208 = vld [vmem:[%s3 + $0x40] sm:$0xf]
    %v209 = vld [vmem:[%s3 + $0x44] sm:$0xf]
    %v210 = vld [vmem:[%s3 + $0x48] sm:$0xf]
    %v211 = vld [vmem:[%s3 + $0x4c] sm:$0xf]
    %v212 = vld [vmem:[%s3 + $0x50] sm:$0xf]
    %v213 = vld [vmem:[%s3 + $0x54] sm:$0xf]
    %v214 = vld [vmem:[%s3 + $0x58] sm:$0xf]
    %v215 = vld [vmem:[%s3 + $0x5c] sm:$0xf]
    %v216 = vld [vmem:[%s3 + $0x60] sm:$0xf]
    %v217 = vld [vmem:[%s3 + $0x64] sm:$0xf]
    %v218 = vld [vmem:[%s3 + $0x68] sm:$0xf]
    %v219 = vld [vmem:[%s3 + $0x6c] sm:$0xf]
    %v220 = vld [vmem:[%s3 + $0x70] sm:$0xf]
    %v221 = vld [vmem:[%s3 + $0x74] sm:$0xf]
    %v222 = vld [vmem:[%s3 + $0x78] sm:$0xf]
    %v223 = vld [vmem:[%s3 + $0x7c] sm:$0xf]
    %v224 = vld [vmem:[#allocation6] sm:$0x1]
    %v226 = vlaneseq
    %v227 = vshrl.u32 %v226, 7
    %v228 = vsub.s32 0, %v227
    %v229 = vrot.slane %v224, %v228
    %v263 = vunpack.c.l.b16 %v192
    %v264 = vunpack.c.l.b16 %v193
    %v265 = vunpack.c.l.b16 %v194
    %v266 = vunpack.c.l.b16 %v195
    %v267 = vunpack.c.l.b16 %v196
    %v268 = vunpack.c.l.b16 %v197
    %v269 = vunpack.c.l.b16 %v198
    %v270 = vunpack.c.l.b16 %v199
    %v271 = vunpack.c.l.b16 %v200
    %v272 = vunpack.c.l.b16 %v201
    %v273 = vunpack.c.l.b16 %v202
    %v274 = vunpack.c.l.b16 %v203
    %v275 = vunpack.c.l.b16 %v204
    %v276 = vunpack.c.l.b16 %v205
    %v277 = vunpack.c.l.b16 %v206
    %v278 = vunpack.c.l.b16 %v207
    %v279 = vunpack.c.l.b16 %v208
    %v280 = vunpack.c.l.b16 %v209
    %v281 = vunpack.c.l.b16 %v210
    %v282 = vunpack.c.l.b16 %v211
    %v283 = vunpack.c.l.b16 %v212
    %v284 = vunpack.c.l.b16 %v213
    %v285 = vunpack.c.l.b16 %v214
    %v286 = vunpack.c.l.b16 %v215
    %v287 = vunpack.c.l.b16 %v216
    %v288 = vunpack.c.l.b16 %v217
    %v289 = vunpack.c.l.b16 %v218
    %v290 = vunpack.c.l.b16 %v219
    %v291 = vunpack.c.l.b16 %v220
    %v292 = vunpack.c.l.b16 %v221
    %v293 = vunpack.c.l.b16 %v222
    %v294 = vunpack.c.l.b16 %v223
    %v295 = vpack.c.b16 %v264, %v263
    %v296 = vpack.c.b16 %v266, %v265
    %v297 = vpack.c.b16 %v268, %v267
    %v298 = vpack.c.b16 %v270, %v269
    %v299 = vpack.c.b16 %v272, %v271
    %v300 = vpack.c.b16 %v274, %v273
    %v301 = vpack.c.b16 %v276, %v275
    %v302 = vpack.c.b16 %v278, %v277
    %v303 = vpack.c.b16 %v280, %v279
    %v304 = vpack.c.b16 %v282, %v281
    %v305 = vpack.c.b16 %v284, %v283
    %v306 = vpack.c.b16 %v286, %v285
    %v307 = vpack.c.b16 %v288, %v287
    %v308 = vpack.c.b16 %v290, %v289
    %v309 = vpack.c.b16 %v292, %v291
    %v310 = vpack.c.b16 %v294, %v293
    %327 = vmatprep.subr.bf16.mxu0 0
    %328 = vmatpush1.bf16.msra.mxu0 %v295
    %329 = vmatprep.subr.bf16.mxu0 0
    %330 = vmatpush1.bf16.msra.mxu0 %v296
    %331 = vmatprep.subr.bf16.mxu0 0
    %332 = vmatpush1.bf16.msra.mxu0 %v297
    %333 = vmatprep.subr.bf16.mxu0 0
    %334 = vmatpush1.bf16.msra.mxu0 %v298
    %335 = vmatprep.subr.bf16.mxu0 0
    %336 = vmatpush1.bf16.msra.mxu0 %v299
    %337 = vmatprep.subr.bf16.mxu0 0
    %338 = vmatpush1.bf16.msra.mxu0 %v300
    %339 = vmatprep.subr.bf16.mxu0 0
    %340 = vmatpush1.bf16.msra.mxu0 %v301
    %341 = vmatprep.subr.bf16.mxu0 0
    %342 = vmatpush1.bf16.msra.mxu0 %v302
    %343 = vmatprep.subr.bf16.mxu0 0
    %344 = vmatpush1.bf16.msra.mxu0 %v303
    %345 = vmatprep.subr.bf16.mxu0 0
    %346 = vmatpush1.bf16.msra.mxu0 %v304
    %347 = vmatprep.subr.bf16.mxu0 0
    %348 = vmatpush1.bf16.msra.mxu0 %v305
    %349 = vmatprep.subr.bf16.mxu0 0
    %350 = vmatpush1.bf16.msra.mxu0 %v306
    %351 = vmatprep.subr.bf16.mxu0 0
    %352 = vmatpush1.bf16.msra.mxu0 %v307
    %353 = vmatprep.subr.bf16.mxu0 0
    %354 = vmatpush1.bf16.msra.mxu0 %v308
    %355 = vmatprep.subr.bf16.mxu0 0
    %356 = vmatpush1.bf16.msra.mxu0 %v309
    %357 = vmatprep.subr.bf16.mxu0 0
    %358 = vmatpush1.bf16.msra.mxu0 %v310
    %359 = vmatprep.mubr.bf16.mxu0 %v191
    %360 = vmatmul.mubr.bf16.gmra.mrb[0].mxu0 %v190
    %v361 = vpop.f32.mrb[0].mxu0
    %v362 = vadd.f32 %v229, %v361
    %v363 = vpop.f32.mrb[0].mxu0
    %v364 = vpop.f32.mrb[0].mxu0
    %v365 = vpop.f32.mrb[0].mxu0
    %366 = vdwg.mxu0
    %v367 = vmax.f32 %v362, 0.0
    %v368 = vpack.c.bf16 %v367, %v367
    %v369 = vld [vmem:[%s5] sm:$0xf]
    %v370 = vld [vmem:[%s5 + $0x4] sm:$0xf]
    %v371 = vld [vmem:[%s5 + $0x8] sm:$0xf]
    %v372 = vld [vmem:[%s5 + $0xc] sm:$0xf]
    %v373 = vld [vmem:[%s5 + $0x10] sm:$0xf]
    %v374 = vld [vmem:[%s5 + $0x14] sm:$0xf]
    %v375 = vld [vmem:[%s5 + $0x18] sm:$0xf]
    %v376 = vld [vmem:[%s5 + $0x1c] sm:$0xf]
    %v377 = vld [vmem:[%s5 + $0x20] sm:$0xf]
    %v378 = vld [vmem:[%s5 + $0x24] sm:$0xf]
    %v379 = vld [vmem:[%s5 + $0x28] sm:$0xf]
    %v380 = vld [vmem:[%s5 + $0x2c] sm:$0xf]
    %v381 = vld [vmem:[%s5 + $0x30] sm:$0xf]
    %v382 = vld [vmem:[%s5 + $0x34] sm:$0xf]
    %v383 = vld [vmem:[%s5 + $0x38] sm:$0xf]
    %v384 = vld [vmem:[%s5 + $0x3c] sm:$0xf]
    %v385 = vld [vmem:[%s6] sm:$0x1]
    %v387 = vlaneseq
    %v388 = vshrl.u32 %v387, 7
    %v389 = vsub.s32 0, %v388
    %v390 = vrot.slane %v385, %v389
    %v408 = vunpack.c.l.b16 %v369
    %v409 = vunpack.c.l.b16 %v370
    %v410 = vunpack.c.l.b16 %v371
    %v411 = vunpack.c.l.b16 %v372
    %v412 = vunpack.c.l.b16 %v373
    %v413 = vunpack.c.l.b16 %v374
    %v414 = vunpack.c.l.b16 %v375
    %v415 = vunpack.c.l.b16 %v376
    %v416 = vunpack.c.l.b16 %v377
    %v417 = vunpack.c.l.b16 %v378
    %v418 = vunpack.c.l.b16 %v379
    %v419 = vunpack.c.l.b16 %v380
    %v420 = vunpack.c.l.b16 %v381
    %v421 = vunpack.c.l.b16 %v382
    %v422 = vunpack.c.l.b16 %v383
    %v423 = vunpack.c.l.b16 %v384
    %v424 = vpack.c.b16 %v409, %v408
    %v425 = vpack.c.b16 %v411, %v410
    %v426 = vpack.c.b16 %v413, %v412
    %v427 = vpack.c.b16 %v415, %v414
    %v428 = vpack.c.b16 %v417, %v416
    %v429 = vpack.c.b16 %v419, %v418
    %v430 = vpack.c.b16 %v421, %v420
    %v431 = vpack.c.b16 %v423, %v422
    %440 = vmatprep.subr.bf16.mxu0 0
    %441 = vmatpush1.bf16.msra.mxu0 %v424
    %442 = vmatprep.subr.bf16.mxu0 0
    %443 = vmatpush1.bf16.msra.mxu0 %v425
    %444 = vmatprep.subr.bf16.mxu0 0
    %445 = vmatpush1.bf16.msra.mxu0 %v426
    %446 = vmatprep.subr.bf16.mxu0 0
    %447 = vmatpush1.bf16.msra.mxu0 %v427
    %448 = vmatprep.subr.bf16.mxu0 0
    %449 = vmatpush1.bf16.msra.mxu0 %v428
    %450 = vmatprep.subr.bf16.mxu0 0
    %451 = vmatpush1.bf16.msra.mxu0 %v429
    %452 = vmatprep.subr.bf16.mxu0 0
    %453 = vmatpush1.bf16.msra.mxu0 %v430
    %454 = vmatprep.subr.bf16.mxu0 0
    %455 = vmatpush1.bf16.msra.mxu0 %v431
    %456 = vmatprep.subr.bf16.mxu0 0
    %457 = vmatpush1.bf16.msra.mxu0 0
    %458 = vmatprep.subr.bf16.mxu0 0
    %459 = vmatpush1.bf16.msra.mxu0 0
    %460 = vmatprep.subr.bf16.mxu0 0
    %461 = vmatpush1.bf16.msra.mxu0 0
    %462 = vmatprep.subr.bf16.mxu0 0
    %463 = vmatpush1.bf16.msra.mxu0 0
    %464 = vmatprep.subr.bf16.mxu0 0
    %465 = vmatpush1.bf16.msra.mxu0 0
    %466 = vmatprep.subr.bf16.mxu0 0
    %467 = vmatpush1.bf16.msra.mxu0 0
    %468 = vmatprep.subr.bf16.mxu0 0
    %469 = vmatpush1.bf16.msra.mxu0 0
    %470 = vmatprep.subr.bf16.mxu0 0
    %471 = vmatpush1.bf16.msra.mxu0 0
    %472 = vmatprep.mubr.bf16.mxu0 0
    %473 = vmatmul.mubr.bf16.gmra.mrb[0].mxu0 %v368
    %v474 = vpop.f32.mrb[0].mxu0
    %v475 = vadd.f32 %v390, %v474
    %v476 = vpop.f32.mrb[0].mxu0
    %v477 = vpop.f32.mrb[0].mxu0
    %v478 = vpop.f32.mrb[0].mxu0
    %479 = vdwg.mxu0
    %v480 = vmax.f32 %v475, 0.0
    %v481 = vpack.c.bf16 %v480, %v480
    %v482 = vld [vmem:[%s7] sm:$0xf]
    %v483 = vld [vmem:[%s7 + $0x4] sm:$0xf]
    %v484 = vld [vmem:[%s7 + $0x8] sm:$0xf]
    %v485 = vld [vmem:[%s7 + $0xc] sm:$0xf]
    %v486 = vld [vmem:[%s7 + $0x10] sm:$0xf]
    %v487 = vld [vmem:[%s7 + $0x14] sm:$0xf]
    %v488 = vld [vmem:[%s7 + $0x18] sm:$0xf]
    %v489 = vld [vmem:[%s7 + $0x1c] sm:$0xf]
    %v490 = vld [vmem:[%s8] sm:$0x1]
    %v492 = vlaneseq
    %v493 = vshrl.u32 %v492, 7
    %v494 = vsub.s32 0, %v493
    %v495 = vrot.slane %v490, %v494
    %v505 = vunpack.c.l.b16 %v482
    %v506 = vunpack.c.l.b16 %v483
    %v507 = vunpack.c.l.b16 %v484
    %v508 = vunpack.c.l.b16 %v485
    %v509 = vunpack.c.l.b16 %v486
    %v510 = vunpack.c.l.b16 %v487
    %v511 = vunpack.c.l.b16 %v488
    %v512 = vunpack.c.l.b16 %v489
    %v513 = vpack.c.b16 %v506, %v505
    %v514 = vpack.c.b16 %v508, %v507
    %v515 = vpack.c.b16 %v510, %v509
    %v516 = vpack.c.b16 %v512, %v511
    %vm521 = vcmask 523264
    %v523 = vsel %vm521, %v481, 0
    %525 = vmatprep.subr.bf16.mxu0 0
    %526 = vmatpush1.bf16.msra.mxu0 %v513
    %527 = vmatprep.subr.bf16.mxu0 0
    %528 = vmatpush1.bf16.msra.mxu0 %v514
    %529 = vmatprep.subr.bf16.mxu0 0
    %530 = vmatpush1.bf16.msra.mxu0 %v515
    %531 = vmatprep.subr.bf16.mxu0 0
    %532 = vmatpush1.bf16.msra.mxu0 %v516
    %533 = vmatprep.subr.bf16.mxu0 0
    %534 = vmatpush1.bf16.msra.mxu0 0
    %535 = vmatprep.subr.bf16.mxu0 0
    %536 = vmatpush1.bf16.msra.mxu0 0
    %537 = vmatprep.subr.bf16.mxu0 0
    %538 = vmatpush1.bf16.msra.mxu0 0
    %539 = vmatprep.subr.bf16.mxu0 0
    %540 = vmatpush1.bf16.msra.mxu0 0
    %541 = vmatprep.subr.bf16.mxu0 0
    %542 = vmatpush1.bf16.msra.mxu0 0
    %543 = vmatprep.subr.bf16.mxu0 0
    %544 = vmatpush1.bf16.msra.mxu0 0
    %545 = vmatprep.subr.bf16.mxu0 0
    %546 = vmatpush1.bf16.msra.mxu0 0
    %547 = vmatprep.subr.bf16.mxu0 0
    %548 = vmatpush1.bf16.msra.mxu0 0
    %549 = vmatprep.subr.bf16.mxu0 0
    %550 = vmatpush1.bf16.msra.mxu0 0
    %551 = vmatprep.subr.bf16.mxu0 0
    %552 = vmatpush1.bf16.msra.mxu0 0
    %553 = vmatprep.subr.bf16.mxu0 0
    %554 = vmatpush1.bf16.msra.mxu0 0
    %555 = vmatprep.subr.bf16.mxu0 0
    %556 = vmatpush1.bf16.msra.mxu0 0
    %557 = vmatprep.mubr.bf16.mxu0 0
    %558 = vmatmul.mubr.bf16.gmra.mrb[0].mxu0 %v523
    %v559 = vpop.f32.mrb[0].mxu0
    %v560 = vadd.f32 %v495, %v559
    %v561 = vpop.f32.mrb[0].mxu0
    %v562 = vpop.f32.mrb[0].mxu0
    %v563 = vpop.f32.mrb[0].mxu0
    %564 = vdwg.mxu0
    %vm565 = vcmask 31744
    %566 = vst.msk [vmem:[%s9] sm:$0xff] %vm565, %v560
    // Predicated region
    $region50: #{mlp_forward.1} parent=1 // pred_check
      _
    $region51: #{mlp_forward.1} parent=1 // pred_check_branch
      %568 = sbr.rel (0) target = $region53
    $region52: #{mlp_forward.1} parent=1 // pred_region
      _
    $region53: #{mlp_forward.1} parent=1 // pred_fallthru
      _
    // Predicated region
    $region54: #{mlp_forward.1} parent=1 // pred_check
      _
    $region55: #{mlp_forward.1} parent=1 // pred_check_branch
      %570 = sbr.rel (0) target = $region57
    $region56: #{mlp_forward.1} parent=1 // pred_region
      _
    $region57: #{mlp_forward.1} parent=1 // pred_fallthru
      _
    %571 = vsyncpa [#allocation3], 1
    %572 = vsyncpa [#allocation5], 1

</llo_original>
